<compile_context>
chip_gen: v6e
topology: v6e:2x2x1
jax: 0.10.0
libtpu: 0.0.40
codegen_flags: <defaults>
</compile_context>

<pallas_src>
import functools

import jax
import jax.numpy as jnp
import numpy as np
from jax import lax
from jax.experimental import pallas as pl
from jax.experimental.pallas import tpu as pltpu


# ----------------------------------------------------------------------------
# Fused Pallas kernel: conv(3x3, s=2, p=1) + bias + ReLU + bilinear resize
# ----------------------------------------------------------------------------
def _keepres_fused_kernel(xsd_ref, w2_ref, b2_ref, bmt_ref, ablk_ref, o_ref,
                          *, kh, kw, cin, oh, ow):
    """One batch element per grid step.

    xsd_ref : (1, 4, cin, Hp/2, Wp/2) f32  space-to-depth padded input:
              xsd[0, 2r+c, ci, p, q] == xpad[ci, 2p+r, 2q+c]
    w2_ref  : (Cout*oh, kh*kw*cin*oh) bf16 block-structured conv weight
    b2_ref  : (Cout*oh, 1)            f32  bias repeated per conv output row
    bmt_ref : (ow, W)                 bf16 column-resize matrix (Bm^T)
    ablk_ref: (Cout*H, Cout*oh)       bf16 blockdiag(I_Cout (x) A) row-resize
    o_ref   : (1, Cout*H, W)          f32  NCHW-major output slab
    """
    # ---- in-kernel im2col (transposed layout: rows = (tap, cin, oh)) --------
    # Every tap (i, j) of the stride-2 conv is an UN-strided (oh, ow) window of
    # one of the four space-to-depth parity planes -> plain static slices, no
    # strided lane gathers, no 9x patches array in HBM.
    rows = []
    for i in range(kh):
        for j in range(kw):
            rc = 2 * (i % 2) + (j % 2)        # which parity plane
            r0, c0 = i // 2, j // 2           # offset inside that plane
            for ci in range(cin):
                rows.append(xsd_ref[0, rc, ci, r0:r0 + oh, c0:c0 + ow])  # (oh, ow)
    patches = jnp.concatenate(rows, axis=0).astype(jnp.bfloat16)  # (kh*kw*cin*oh, ow)

    # ---- conv + bias + ReLU : one bf16 MXU matmul, f32 accumulation ---------
    y = jnp.dot(w2_ref[...], patches,
                preferred_element_type=jnp.float32)               # (Cout*oh, ow)
    y = jnp.maximum(y + b2_ref[...], 0.0)

    # ---- separable bilinear resize, all channels in two 2-D matmuls --------
    u = jnp.dot(y.astype(jnp.bfloat16), bmt_ref[...],
                preferred_element_type=jnp.float32)               # (Cout*oh, W)
    z = jnp.dot(ablk_ref[...], u.astype(jnp.bfloat16),
                preferred_element_type=jnp.float32)               # (Cout*H, W)
    o_ref[0] = z


# ----------------------------------------------------------------------------
# Host-side glue: layout plumbing + matrices (cheap, 1x the input bytes)
# ----------------------------------------------------------------------------
def bilinear_matrix(out_size, in_size):
    """Interpolation matrix matching PyTorch bilinear, align_corners=False."""
    if out_size == in_size:
        return jnp.eye(out_size, dtype=jnp.float32)
    scale = in_size / out_size
    dst = jnp.arange(out_size, dtype=jnp.float32)
    src = jnp.maximum((dst + 0.5) * scale - 0.5, 0.0)
    i0 = jnp.minimum(jnp.floor(src).astype(jnp.int32), in_size - 1)
    i1 = jnp.minimum(i0 + 1, in_size - 1)
    w1 = src - i0.astype(jnp.float32)
    w0 = 1.0 - w1
    return (w0[:, None] * jax.nn.one_hot(i0, in_size, dtype=jnp.float32)
            + w1[:, None] * jax.nn.one_hot(i1, in_size, dtype=jnp.float32))


def keepres_forward(x, conv_w, conv_b, output_width=None):
    """KeepRes.forward with net = Conv2d(3x3, stride=2, pad=1) + ReLU, fully fused."""
    B, Cin, H, W = x.shape
    Cout = conv_w.shape[0]
    KH, KW, STRIDE, PAD = 3, 3, 2, 1
    OH = (H + 2 * PAD - KH) // STRIDE + 1
    OW = (W + 2 * PAD - KW) // STRIDE + 1
    TH = H
    TW = W if output_width is None else output_width
    K = KH * KW * Cin

    # TODO(synk): the 'area' (downsampling) branch of `interpolate` is not needed
    # for this net (it always shrinks the map -> upsample -> bilinear) and is not
    # implemented.

    # Factor-2 space-to-depth of the zero-padded input so every conv tap is an
    # un-strided window inside the kernel (no 9x im2col expansion in HBM).
    Hp, Wp = H + 2 * PAD, W + 2 * PAD
    eh, ew = Hp % 2, Wp % 2
    xpad = jnp.pad(x, ((0, 0), (0, 0), (PAD, PAD + eh), (PAD, PAD + ew)))
    Hh, Wh = (Hp + eh) // 2, (Wp + ew) // 2
    xsd = (xpad.reshape(B, Cin, Hh, 2, Wh, 2)
               .transpose(0, 3, 5, 1, 2, 4)            # (B, 2, 2, Cin, Hh, Wh)
               .reshape(B, 4, Cin, Hh, Wh)             # [b,2r+c,ci,p,q]=xpad[b,ci,2p+r,2q+c]
           ).astype(jnp.float32)

    # Block-structured conv weight: conv lands directly in (Cout*OH, OW) rows.
    wmat = conv_w.transpose(0, 2, 3, 1).reshape(Cout, K)        # [c, (i*KW+j)*Cin+ci]
    eye_oh = jnp.eye(OH, dtype=jnp.float32)
    w2 = (wmat[:, None, :, None] * eye_oh[None, :, None, :]
          ).reshape(Cout * OH, K * OH).astype(jnp.bfloat16)
    bias2 = jnp.repeat(conv_b, OH)[:, None].astype(jnp.float32)  # (Cout*OH, 1)

    # Separable bilinear resize matrices (align_corners=False), applied to ALL
    # channel planes at once via plain 2-D matmuls.
    A = bilinear_matrix(TH, OH)                                  # (TH, OH)
    Bm = bilinear_matrix(TW, OW)                                 # (TW, OW)
    a_blk = jnp.kron(jnp.eye(Cout, dtype=jnp.float32), A).astype(jnp.bfloat16)
    bmt = Bm.T.astype(jnp.bfloat16)                              # (OW, TW)

    kernel = functools.partial(_keepres_fused_kernel,
                               kh=KH, kw=KW, cin=Cin, oh=OH, ow=OW)

    # grid=(B,) "parallel": two fat steps (v7x shards them over its 2 TCs).
    # Constant index_maps keep the grid-invariant operands resident in VMEM.
    # NOTE(v7x): at production sizes, tile Cout*TH (sublane axis) and set
    # pltpu.CompilerParams(vmem_limit_bytes=...) for the 64 MiB VMEM budget;
    # at these shapes every operand is a few KiB so defaults are fine.
    out_flat = pl.pallas_call(
        kernel,
        out_shape=jax.ShapeDtypeStruct((B, Cout * TH, TW), jnp.float32),
        grid=(B,),
        in_specs=[
            pl.BlockSpec((1, 4, Cin, Hh, Wh), lambda b: (b, 0, 0, 0, 0)),
            pl.BlockSpec((Cout * OH, K * OH), lambda b: (0, 0)),
            pl.BlockSpec((Cout * OH, 1), lambda b: (0, 0)),
            pl.BlockSpec((OW, TW), lambda b: (0, 0)),
            pl.BlockSpec((Cout * TH, Cout * OH), lambda b: (0, 0)),
        ],
        out_specs=pl.BlockSpec((1, Cout * TH, TW), lambda b: (b, 0, 0)),
        compiler_params=pltpu.CompilerParams(dimension_semantics=("parallel",)),
    )(xsd, w2, bias2, bmt, a_blk)

    # Free row-major split to NCHW.
    return out_flat.reshape(B, Cout, TH, TW)


# ----------------------------------------------------------------------------
if __name__ == "__main__":
    B, Cin, Cout, H, W = 2, 4, 8, 16, 16

    key = jax.random.PRNGKey(0)
    kx, kw, kb = jax.random.split(key, 3)
    x = jax.random.normal(kx, (B, Cin, H, W), dtype=jnp.float32)
    conv_w = jax.random.normal(kw, (Cout, Cin, 3, 3), dtype=jnp.float32) * 0.1
    conv_b = jax.random.normal(kb, (Cout,), dtype=jnp.float32) * 0.1

    out = jax.jit(keepres_forward)(x, conv_w, conv_b)
    out = jax.block_until_ready(out)
    assert out.shape == (B, Cout, H, W), out.shape

    # Plain-JAX f32 reference (lax conv + separable bilinear) for sanity.
    conv_ref = lax.conv_general_dilated(
        x, conv_w, window_strides=(2, 2), padding=((1, 1), (1, 1)),
        dimension_numbers=("NCHW", "OIHW", "NCHW"))
    conv_ref = jnp.maximum(conv_ref + conv_b[None, :, None, None], 0.0)
    A = bilinear_matrix(H, conv_ref.shape[-2])
    Bm = bilinear_matrix(W, conv_ref.shape[-1])
    ref = jnp.einsum("ho,bcov,wv->bchw", A, conv_ref, Bm)

    np.testing.assert_allclose(np.asarray(out), np.asarray(ref), rtol=2e-2, atol=2e-2)
    print("KERNEL_OK")
</pallas_src>

<mosaic_0001>
module attributes {stable_mosaic.version = 11 : i64} {
  func.func @_keepres_fused_kernel(%arg0: i32, %arg1: memref<1x4x4x9x9xf32, #tpu.memory_space<vmem>>, %arg2: memref<64x288xbf16, #tpu.memory_space<vmem>>, %arg3: memref<64x1xf32, #tpu.memory_space<vmem>>, %arg4: memref<8x16xbf16, #tpu.memory_space<vmem>>, %arg5: memref<128x64xbf16, #tpu.memory_space<vmem>>, %arg6: memref<1x128x16xf32, #tpu.memory_space<vmem>>) attributes {dimension_semantics = [#tpu.dimension_semantics<parallel>], iteration_bounds = array<i64: 2>, scalar_prefetch = 0 : i64, scratch_operands = 0 : i64, tpu.core_type = #tpu.core_type<tc>, window_params = [{transform_indices = @transform_0, window_bounds = array<i64: 1, 4, 4, 9, 9>}, {pipeline_mode = #tpu.pipeline_mode<synchronous>, transform_indices = @transform_1, window_bounds = array<i64: 64, 288>}, {pipeline_mode = #tpu.pipeline_mode<synchronous>, transform_indices = @transform_2, window_bounds = array<i64: 64, 1>}, {pipeline_mode = #tpu.pipeline_mode<synchronous>, transform_indices = @transform_3, window_bounds = array<i64: 8, 16>}, {pipeline_mode = #tpu.pipeline_mode<synchronous>, transform_indices = @transform_4, window_bounds = array<i64: 128, 64>}, {transform_indices = @transform_5, window_bounds = array<i64: 1, 128, 16>}]} {
    %c0 = arith.constant 0 : index
    %c0_0 = arith.constant 0 : index
    %c0_1 = arith.constant 0 : index
    %c0_2 = arith.constant 0 : index
    %c0_3 = arith.constant 0 : index
    %0 = vector.load %arg1[%c0, %c0_0, %c0_1, %c0_2, %c0_3] : memref<1x4x4x9x9xf32, #tpu.memory_space<vmem>>, vector<1x1x1x8x8xf32>
    %1 = vector.shape_cast %0 : vector<1x1x1x8x8xf32> to vector<8x8xf32>
    %c0_4 = arith.constant 0 : index
    %c0_5 = arith.constant 0 : index
    %c1 = arith.constant 1 : index
    %c0_6 = arith.constant 0 : index
    %c0_7 = arith.constant 0 : index
    %2 = vector.load %arg1[%c0_4, %c0_5, %c1, %c0_6, %c0_7] : memref<1x4x4x9x9xf32, #tpu.memory_space<vmem>>, vector<1x1x1x8x8xf32>
    %3 = vector.shape_cast %2 : vector<1x1x1x8x8xf32> to vector<8x8xf32>
    %c0_8 = arith.constant 0 : index
    %c0_9 = arith.constant 0 : index
    %c2 = arith.constant 2 : index
    %c0_10 = arith.constant 0 : index
    %c0_11 = arith.constant 0 : index
    %4 = vector.load %arg1[%c0_8, %c0_9, %c2, %c0_10, %c0_11] : memref<1x4x4x9x9xf32, #tpu.memory_space<vmem>>, vector<1x1x1x8x8xf32>
    %5 = vector.shape_cast %4 : vector<1x1x1x8x8xf32> to vector<8x8xf32>
    %c0_12 = arith.constant 0 : index
    %c0_13 = arith.constant 0 : index
    %c3 = arith.constant 3 : index
    %c0_14 = arith.constant 0 : index
    %c0_15 = arith.constant 0 : index
    %6 = vector.load %arg1[%c0_12, %c0_13, %c3, %c0_14, %c0_15] : memref<1x4x4x9x9xf32, #tpu.memory_space<vmem>>, vector<1x1x1x8x8xf32>
    %7 = vector.shape_cast %6 : vector<1x1x1x8x8xf32> to vector<8x8xf32>
    %c0_16 = arith.constant 0 : index
    %c1_17 = arith.constant 1 : index
    %c0_18 = arith.constant 0 : index
    %c0_19 = arith.constant 0 : index
    %c0_20 = arith.constant 0 : index
    %8 = vector.load %arg1[%c0_16, %c1_17, %c0_18, %c0_19, %c0_20] : memref<1x4x4x9x9xf32, #tpu.memory_space<vmem>>, vector<1x1x1x8x8xf32>
    %9 = vector.shape_cast %8 : vector<1x1x1x8x8xf32> to vector<8x8xf32>
    %c0_21 = arith.constant 0 : index
    %c1_22 = arith.constant 1 : index
    %c1_23 = arith.constant 1 : index
    %c0_24 = arith.constant 0 : index
    %c0_25 = arith.constant 0 : index
    %10 = vector.load %arg1[%c0_21, %c1_22, %c1_23, %c0_24, %c0_25] : memref<1x4x4x9x9xf32, #tpu.memory_space<vmem>>, vector<1x1x1x8x8xf32>
    %11 = vector.shape_cast %10 : vector<1x1x1x8x8xf32> to vector<8x8xf32>
    %c0_26 = arith.constant 0 : index
    %c1_27 = arith.constant 1 : index
    %c2_28 = arith.constant 2 : index
    %c0_29 = arith.constant 0 : index
    %c0_30 = arith.constant 0 : index
    %12 = vector.load %arg1[%c0_26, %c1_27, %c2_28, %c0_29, %c0_30] : memref<1x4x4x9x9xf32, #tpu.memory_space<vmem>>, vector<1x1x1x8x8xf32>
    %13 = vector.shape_cast %12 : vector<1x1x1x8x8xf32> to vector<8x8xf32>
    %c0_31 = arith.constant 0 : index
    %c1_32 = arith.constant 1 : index
    %c3_33 = arith.constant 3 : index
    %c0_34 = arith.constant 0 : index
    %c0_35 = arith.constant 0 : index
    %14 = vector.load %arg1[%c0_31, %c1_32, %c3_33, %c0_34, %c0_35] : memref<1x4x4x9x9xf32, #tpu.memory_space<vmem>>, vector<1x1x1x8x8xf32>
    %15 = vector.shape_cast %14 : vector<1x1x1x8x8xf32> to vector<8x8xf32>
    %c0_36 = arith.constant 0 : index
    %c0_37 = arith.constant 0 : index
    %c0_38 = arith.constant 0 : index
    %c0_39 = arith.constant 0 : index
    %c1_40 = arith.constant 1 : index
    %16 = vector.load %arg1[%c0_36, %c0_37, %c0_38, %c0_39, %c1_40] : memref<1x4x4x9x9xf32, #tpu.memory_space<vmem>>, vector<1x1x1x8x8xf32>
    %17 = vector.shape_cast %16 : vector<1x1x1x8x8xf32> to vector<8x8xf32>
    %c0_41 = arith.constant 0 : index
    %c0_42 = arith.constant 0 : index
    %c1_43 = arith.constant 1 : index
    %c0_44 = arith.constant 0 : index
    %c1_45 = arith.constant 1 : index
    %18 = vector.load %arg1[%c0_41, %c0_42, %c1_43, %c0_44, %c1_45] : memref<1x4x4x9x9xf32, #tpu.memory_space<vmem>>, vector<1x1x1x8x8xf32>
    %19 = vector.shape_cast %18 : vector<1x1x1x8x8xf32> to vector<8x8xf32>
    %c0_46 = arith.constant 0 : index
    %c0_47 = arith.constant 0 : index
    %c2_48 = arith.constant 2 : index
    %c0_49 = arith.constant 0 : index
    %c1_50 = arith.constant 1 : index
    %20 = vector.load %arg1[%c0_46, %c0_47, %c2_48, %c0_49, %c1_50] : memref<1x4x4x9x9xf32, #tpu.memory_space<vmem>>, vector<1x1x1x8x8xf32>
    %21 = vector.shape_cast %20 : vector<1x1x1x8x8xf32> to vector<8x8xf32>
    %c0_51 = arith.constant 0 : index
    %c0_52 = arith.constant 0 : index
    %c3_53 = arith.constant 3 : index
    %c0_54 = arith.constant 0 : index
    %c1_55 = arith.constant 1 : index
    %22 = vector.load %arg1[%c0_51, %c0_52, %c3_53, %c0_54, %c1_55] : memref<1x4x4x9x9xf32, #tpu.memory_space<vmem>>, vector<1x1x1x8x8xf32>
    %23 = vector.shape_cast %22 : vector<1x1x1x8x8xf32> to vector<8x8xf32>
    %c0_56 = arith.constant 0 : index
    %c2_57 = arith.constant 2 : index
    %c0_58 = arith.constant 0 : index
    %c0_59 = arith.constant 0 : index
    %c0_60 = arith.constant 0 : index
    %24 = vector.load %arg1[%c0_56, %c2_57, %c0_58, %c0_59, %c0_60] : memref<1x4x4x9x9xf32, #tpu.memory_space<vmem>>, vector<1x1x1x8x8xf32>
    %25 = vector.shape_cast %24 : vector<1x1x1x8x8xf32> to vector<8x8xf32>
    %c0_61 = arith.constant 0 : index
    %c2_62 = arith.constant 2 : index
    %c1_63 = arith.constant 1 : index
    %c0_64 = arith.constant 0 : index
    %c0_65 = arith.constant 0 : index
    %26 = vector.load %arg1[%c0_61, %c2_62, %c1_63, %c0_64, %c0_65] : memref<1x4x4x9x9xf32, #tpu.memory_space<vmem>>, vector<1x1x1x8x8xf32>
    %27 = vector.shape_cast %26 : vector<1x1x1x8x8xf32> to vector<8x8xf32>
    %c0_66 = arith.constant 0 : index
    %c2_67 = arith.constant 2 : index
    %c2_68 = arith.constant 2 : index
    %c0_69 = arith.constant 0 : index
    %c0_70 = arith.constant 0 : index
    %28 = vector.load %arg1[%c0_66, %c2_67, %c2_68, %c0_69, %c0_70] : memref<1x4x4x9x9xf32, #tpu.memory_space<vmem>>, vector<1x1x1x8x8xf32>
    %29 = vector.shape_cast %28 : vector<1x1x1x8x8xf32> to vector<8x8xf32>
    %c0_71 = arith.constant 0 : index
    %c2_72 = arith.constant 2 : index
    %c3_73 = arith.constant 3 : index
    %c0_74 = arith.constant 0 : index
    %c0_75 = arith.constant 0 : index
    %30 = vector.load %arg1[%c0_71, %c2_72, %c3_73, %c0_74, %c0_75] : memref<1x4x4x9x9xf32, #tpu.memory_space<vmem>>, vector<1x1x1x8x8xf32>
    %31 = vector.shape_cast %30 : vector<1x1x1x8x8xf32> to vector<8x8xf32>
    %c0_76 = arith.constant 0 : index
    %c3_77 = arith.constant 3 : index
    %c0_78 = arith.constant 0 : index
    %c0_79 = arith.constant 0 : index
    %c0_80 = arith.constant 0 : index
    %32 = vector.load %arg1[%c0_76, %c3_77, %c0_78, %c0_79, %c0_80] : memref<1x4x4x9x9xf32, #tpu.memory_space<vmem>>, vector<1x1x1x8x8xf32>
    %33 = vector.shape_cast %32 : vector<1x1x1x8x8xf32> to vector<8x8xf32>
    %c0_81 = arith.constant 0 : index
    %c3_82 = arith.constant 3 : index
    %c1_83 = arith.constant 1 : index
    %c0_84 = arith.constant 0 : index
    %c0_85 = arith.constant 0 : index
    %34 = vector.load %arg1[%c0_81, %c3_82, %c1_83, %c0_84, %c0_85] : memref<1x4x4x9x9xf32, #tpu.memory_space<vmem>>, vector<1x1x1x8x8xf32>
    %35 = vector.shape_cast %34 : vector<1x1x1x8x8xf32> to vector<8x8xf32>
    %c0_86 = arith.constant 0 : index
    %c3_87 = arith.constant 3 : index
    %c2_88 = arith.constant 2 : index
    %c0_89 = arith.constant 0 : index
    %c0_90 = arith.constant 0 : index
    %36 = vector.load %arg1[%c0_86, %c3_87, %c2_88, %c0_89, %c0_90] : memref<1x4x4x9x9xf32, #tpu.memory_space<vmem>>, vector<1x1x1x8x8xf32>
    %37 = vector.shape_cast %36 : vector<1x1x1x8x8xf32> to vector<8x8xf32>
    %c0_91 = arith.constant 0 : index
    %c3_92 = arith.constant 3 : index
    %c3_93 = arith.constant 3 : index
    %c0_94 = arith.constant 0 : index
    %c0_95 = arith.constant 0 : index
    %38 = vector.load %arg1[%c0_91, %c3_92, %c3_93, %c0_94, %c0_95] : memref<1x4x4x9x9xf32, #tpu.memory_space<vmem>>, vector<1x1x1x8x8xf32>
    %39 = vector.shape_cast %38 : vector<1x1x1x8x8xf32> to vector<8x8xf32>
    %c0_96 = arith.constant 0 : index
    %c2_97 = arith.constant 2 : index
    %c0_98 = arith.constant 0 : index
    %c0_99 = arith.constant 0 : index
    %c1_100 = arith.constant 1 : index
    %40 = vector.load %arg1[%c0_96, %c2_97, %c0_98, %c0_99, %c1_100] : memref<1x4x4x9x9xf32, #tpu.memory_space<vmem>>, vector<1x1x1x8x8xf32>
    %41 = vector.shape_cast %40 : vector<1x1x1x8x8xf32> to vector<8x8xf32>
    %c0_101 = arith.constant 0 : index
    %c2_102 = arith.constant 2 : index
    %c1_103 = arith.constant 1 : index
    %c0_104 = arith.constant 0 : index
    %c1_105 = arith.constant 1 : index
    %42 = vector.load %arg1[%c0_101, %c2_102, %c1_103, %c0_104, %c1_105] : memref<1x4x4x9x9xf32, #tpu.memory_space<vmem>>, vector<1x1x1x8x8xf32>
    %43 = vector.shape_cast %42 : vector<1x1x1x8x8xf32> to vector<8x8xf32>
    %c0_106 = arith.constant 0 : index
    %c2_107 = arith.constant 2 : index
    %c2_108 = arith.constant 2 : index
    %c0_109 = arith.constant 0 : index
    %c1_110 = arith.constant 1 : index
    %44 = vector.load %arg1[%c0_106, %c2_107, %c2_108, %c0_109, %c1_110] : memref<1x4x4x9x9xf32, #tpu.memory_space<vmem>>, vector<1x1x1x8x8xf32>
    %45 = vector.shape_cast %44 : vector<1x1x1x8x8xf32> to vector<8x8xf32>
    %c0_111 = arith.constant 0 : index
    %c2_112 = arith.constant 2 : index
    %c3_113 = arith.constant 3 : index
    %c0_114 = arith.constant 0 : index
    %c1_115 = arith.constant 1 : index
    %46 = vector.load %arg1[%c0_111, %c2_112, %c3_113, %c0_114, %c1_115] : memref<1x4x4x9x9xf32, #tpu.memory_space<vmem>>, vector<1x1x1x8x8xf32>
    %47 = vector.shape_cast %46 : vector<1x1x1x8x8xf32> to vector<8x8xf32>
    %c0_116 = arith.constant 0 : index
    %c0_117 = arith.constant 0 : index
    %c0_118 = arith.constant 0 : index
    %c1_119 = arith.constant 1 : index
    %c0_120 = arith.constant 0 : index
    %48 = vector.load %arg1[%c0_116, %c0_117, %c0_118, %c1_119, %c0_120] : memref<1x4x4x9x9xf32, #tpu.memory_space<vmem>>, vector<1x1x1x8x8xf32>
    %49 = vector.shape_cast %48 : vector<1x1x1x8x8xf32> to vector<8x8xf32>
    %c0_121 = arith.constant 0 : index
    %c0_122 = arith.constant 0 : index
    %c1_123 = arith.constant 1 : index
    %c1_124 = arith.constant 1 : index
    %c0_125 = arith.constant 0 : index
    %50 = vector.load %arg1[%c0_121, %c0_122, %c1_123, %c1_124, %c0_125] : memref<1x4x4x9x9xf32, #tpu.memory_space<vmem>>, vector<1x1x1x8x8xf32>
    %51 = vector.shape_cast %50 : vector<1x1x1x8x8xf32> to vector<8x8xf32>
    %c0_126 = arith.constant 0 : index
    %c0_127 = arith.constant 0 : index
    %c2_128 = arith.constant 2 : index
    %c1_129 = arith.constant 1 : index
    %c0_130 = arith.constant 0 : index
    %52 = vector.load %arg1[%c0_126, %c0_127, %c2_128, %c1_129, %c0_130] : memref<1x4x4x9x9xf32, #tpu.memory_space<vmem>>, vector<1x1x1x8x8xf32>
    %53 = vector.shape_cast %52 : vector<1x1x1x8x8xf32> to vector<8x8xf32>
    %c0_131 = arith.constant 0 : index
    %c0_132 = arith.constant 0 : index
    %c3_133 = arith.constant 3 : index
    %c1_134 = arith.constant 1 : index
    %c0_135 = arith.constant 0 : index
    %54 = vector.load %arg1[%c0_131, %c0_132, %c3_133, %c1_134, %c0_135] : memref<1x4x4x9x9xf32, #tpu.memory_space<vmem>>, vector<1x1x1x8x8xf32>
    %55 = vector.shape_cast %54 : vector<1x1x1x8x8xf32> to vector<8x8xf32>
    %c0_136 = arith.constant 0 : index
    %c1_137 = arith.constant 1 : index
    %c0_138 = arith.constant 0 : index
    %c1_139 = arith.constant 1 : index
    %c0_140 = arith.constant 0 : index
    %56 = vector.load %arg1[%c0_136, %c1_137, %c0_138, %c1_139, %c0_140] : memref<1x4x4x9x9xf32, #tpu.memory_space<vmem>>, vector<1x1x1x8x8xf32>
    %57 = vector.shape_cast %56 : vector<1x1x1x8x8xf32> to vector<8x8xf32>
    %c0_141 = arith.constant 0 : index
    %c1_142 = arith.constant 1 : index
    %c1_143 = arith.constant 1 : index
    %c1_144 = arith.constant 1 : index
    %c0_145 = arith.constant 0 : index
    %58 = vector.load %arg1[%c0_141, %c1_142, %c1_143, %c1_144, %c0_145] : memref<1x4x4x9x9xf32, #tpu.memory_space<vmem>>, vector<1x1x1x8x8xf32>
    %59 = vector.shape_cast %58 : vector<1x1x1x8x8xf32> to vector<8x8xf32>
    %c0_146 = arith.constant 0 : index
    %c1_147 = arith.constant 1 : index
    %c2_148 = arith.constant 2 : index
    %c1_149 = arith.constant 1 : index
    %c0_150 = arith.constant 0 : index
    %60 = vector.load %arg1[%c0_146, %c1_147, %c2_148, %c1_149, %c0_150] : memref<1x4x4x9x9xf32, #tpu.memory_space<vmem>>, vector<1x1x1x8x8xf32>
    %61 = vector.shape_cast %60 : vector<1x1x1x8x8xf32> to vector<8x8xf32>
    %c0_151 = arith.constant 0 : index
    %c1_152 = arith.constant 1 : index
    %c3_153 = arith.constant 3 : index
    %c1_154 = arith.constant 1 : index
    %c0_155 = arith.constant 0 : index
    %62 = vector.load %arg1[%c0_151, %c1_152, %c3_153, %c1_154, %c0_155] : memref<1x4x4x9x9xf32, #tpu.memory_space<vmem>>, vector<1x1x1x8x8xf32>
    %63 = vector.shape_cast %62 : vector<1x1x1x8x8xf32> to vector<8x8xf32>
    %c0_156 = arith.constant 0 : index
    %c0_157 = arith.constant 0 : index
    %c0_158 = arith.constant 0 : index
    %c1_159 = arith.constant 1 : index
    %c1_160 = arith.constant 1 : index
    %64 = vector.load %arg1[%c0_156, %c0_157, %c0_158, %c1_159, %c1_160] : memref<1x4x4x9x9xf32, #tpu.memory_space<vmem>>, vector<1x1x1x8x8xf32>
    %65 = vector.shape_cast %64 : vector<1x1x1x8x8xf32> to vector<8x8xf32>
    %c0_161 = arith.constant 0 : index
    %c0_162 = arith.constant 0 : index
    %c1_163 = arith.constant 1 : index
    %c1_164 = arith.constant 1 : index
    %c1_165 = arith.constant 1 : index
    %66 = vector.load %arg1[%c0_161, %c0_162, %c1_163, %c1_164, %c1_165] : memref<1x4x4x9x9xf32, #tpu.memory_space<vmem>>, vector<1x1x1x8x8xf32>
    %67 = vector.shape_cast %66 : vector<1x1x1x8x8xf32> to vector<8x8xf32>
    %c0_166 = arith.constant 0 : index
    %c0_167 = arith.constant 0 : index
    %c2_168 = arith.constant 2 : index
    %c1_169 = arith.constant 1 : index
    %c1_170 = arith.constant 1 : index
    %68 = vector.load %arg1[%c0_166, %c0_167, %c2_168, %c1_169, %c1_170] : memref<1x4x4x9x9xf32, #tpu.memory_space<vmem>>, vector<1x1x1x8x8xf32>
    %69 = vector.shape_cast %68 : vector<1x1x1x8x8xf32> to vector<8x8xf32>
    %c0_171 = arith.constant 0 : index
    %c0_172 = arith.constant 0 : index
    %c3_173 = arith.constant 3 : index
    %c1_174 = arith.constant 1 : index
    %c1_175 = arith.constant 1 : index
    %70 = vector.load %arg1[%c0_171, %c0_172, %c3_173, %c1_174, %c1_175] : memref<1x4x4x9x9xf32, #tpu.memory_space<vmem>>, vector<1x1x1x8x8xf32>
    %71 = vector.shape_cast %70 : vector<1x1x1x8x8xf32> to vector<8x8xf32>
    %72 = tpu.concatenate %1, %3, %5, %7, %9, %11, %13, %15, %17, %19, %21, %23, %25, %27, %29, %31 in 0 : vector<8x8xf32>, vector<8x8xf32>, vector<8x8xf32>, vector<8x8xf32>, vector<8x8xf32>, vector<8x8xf32>, vector<8x8xf32>, vector<8x8xf32>, vector<8x8xf32>, vector<8x8xf32>, vector<8x8xf32>, vector<8x8xf32>, vector<8x8xf32>, vector<8x8xf32>, vector<8x8xf32>, vector<8x8xf32> -> vector<128x8xf32>
    %73 = tpu.concatenate %33, %35, %37, %39, %41, %43, %45, %47, %49, %51, %53, %55, %57, %59, %61, %63 in 0 : vector<8x8xf32>, vector<8x8xf32>, vector<8x8xf32>, vector<8x8xf32>, vector<8x8xf32>, vector<8x8xf32>, vector<8x8xf32>, vector<8x8xf32>, vector<8x8xf32>, vector<8x8xf32>, vector<8x8xf32>, vector<8x8xf32>, vector<8x8xf32>, vector<8x8xf32>, vector<8x8xf32>, vector<8x8xf32> -> vector<128x8xf32>
    %74 = tpu.concatenate %65, %67, %69, %71 in 0 : vector<8x8xf32>, vector<8x8xf32>, vector<8x8xf32>, vector<8x8xf32> -> vector<32x8xf32>
    %75 = tpu.concatenate %72, %73, %74 in 0 : vector<128x8xf32>, vector<128x8xf32>, vector<32x8xf32> -> vector<288x8xf32>
    %76 = arith.truncf %75 : vector<288x8xf32> to vector<288x8xbf16>
    %c0_176 = arith.constant 0 : index
    %c0_177 = arith.constant 0 : index
    %77 = vector.load %arg2[%c0_176, %c0_177] : memref<64x288xbf16, #tpu.memory_space<vmem>>, vector<64x288xbf16>
    %cst = arith.constant dense<0.000000e+00> : vector<64x8xf32>
    %78 = tpu.matmul %77, %76, %cst {dimension_numbers = #tpu.dot_dimension_numbers<[1], [0], [0], [1], [0, 0, 1, 1], [], []>} : vector<64x288xbf16>, vector<288x8xbf16>, vector<64x8xf32> -> vector<64x8xf32>
    %c0_178 = arith.constant 0 : index
    %c0_179 = arith.constant 0 : index
    %79 = vector.load %arg3[%c0_178, %c0_179] : memref<64x1xf32, #tpu.memory_space<vmem>>, vector<64x1xf32>
    %80 = vector.broadcast %79 : vector<64x1xf32> to vector<64x8xf32>
    %81 = arith.addf %78, %80 : vector<64x8xf32>
    %cst_180 = arith.constant 0.000000e+00 : f32
    %82 = vector.broadcast %cst_180 : f32 to vector<64x8xf32>
    %83 = arith.maximumf %81, %82 : vector<64x8xf32>
    %84 = arith.truncf %83 : vector<64x8xf32> to vector<64x8xbf16>
    %c0_181 = arith.constant 0 : index
    %c0_182 = arith.constant 0 : index
    %85 = vector.load %arg4[%c0_181, %c0_182] : memref<8x16xbf16, #tpu.memory_space<vmem>>, vector<8x16xbf16>
    %cst_183 = arith.constant dense<0.000000e+00> : vector<64x16xf32>
    %86 = tpu.matmul %84, %85, %cst_183 {dimension_numbers = #tpu.dot_dimension_numbers<[1], [0], [0], [1], [0, 0, 1, 1], [], []>} : vector<64x8xbf16>, vector<8x16xbf16>, vector<64x16xf32> -> vector<64x16xf32>
    %c0_184 = arith.constant 0 : index
    %c0_185 = arith.constant 0 : index
    %87 = vector.load %arg5[%c0_184, %c0_185] : memref<128x64xbf16, #tpu.memory_space<vmem>>, vector<128x64xbf16>
    %88 = arith.truncf %86 : vector<64x16xf32> to vector<64x16xbf16>
    %cst_186 = arith.constant dense<0.000000e+00> : vector<128x16xf32>
    %89 = tpu.matmul %87, %88, %cst_186 {dimension_numbers = #tpu.dot_dimension_numbers<[1], [0], [0], [1], [0, 0, 1, 1], [], []>} : vector<128x64xbf16>, vector<64x16xbf16>, vector<128x16xf32> -> vector<128x16xf32>
    %c0_187 = arith.constant 0 : index
    %c0_188 = arith.constant 0 : index
    %c0_189 = arith.constant 0 : index
    %90 = vector.load %arg6[%c0_187, %c0_188, %c0_189] : memref<1x128x16xf32, #tpu.memory_space<vmem>>, vector<1x128x16xf32>
    %91 = vector.shape_cast %90 : vector<1x128x16xf32> to vector<128x16xf32>
    %92 = vector.shape_cast %89 : vector<128x16xf32> to vector<1x128x16xf32>
    tpu.vector_store %arg6[%c0_187, %c0_188, %c0_189], %92 {strides = array<i32>} : memref<1x128x16xf32, #tpu.memory_space<vmem>>, vector<1x128x16xf32>,
    return
  }
  func.func @transform_0(%arg0: i32) -> (i32, i32, i32, i32, i32) {
    %c0_i32 = arith.constant 0 : i32
    %c0_i32_0 = arith.constant 0 : i32
    %c0_i32_1 = arith.constant 0 : i32
    %c0_i32_2 = arith.constant 0 : i32
    %c0_i32_3 = arith.constant 0 : i32
    return %arg0, %c0_i32, %c0_i32_0, %c0_i32_1, %c0_i32_2 : i32, i32, i32, i32, i32
  }
  func.func @transform_1(%arg0: i32) -> (i32, i32) {
    %c0_i32 = arith.constant 0 : i32
    %c0_i32_0 = arith.constant 0 : i32
    %c0_i32_1 = arith.constant 0 : i32
    return %c0_i32, %c0_i32_0 : i32, i32
  }
  func.func @transform_2(%arg0: i32) -> (i32, i32) {
    %c0_i32 = arith.constant 0 : i32
    %c0_i32_0 = arith.constant 0 : i32
    %c0_i32_1 = arith.constant 0 : i32
    return %c0_i32, %c0_i32_0 : i32, i32
  }
  func.func @transform_3(%arg0: i32) -> (i32, i32) {
    %c0_i32 = arith.constant 0 : i32
    %c0_i32_0 = arith.constant 0 : i32
    %c0_i32_1 = arith.constant 0 : i32
    return %c0_i32, %c0_i32_0 : i32, i32
  }
  func.func @transform_4(%arg0: i32) -> (i32, i32) {
    %c0_i32 = arith.constant 0 : i32
    %c0_i32_0 = arith.constant 0 : i32
    %c0_i32_1 = arith.constant 0 : i32
    return %c0_i32, %c0_i32_0 : i32, i32
  }
  func.func @transform_5(%arg0: i32) -> (i32, i32, i32) {
    %c0_i32 = arith.constant 0 : i32
    %c0_i32_0 = arith.constant 0 : i32
    %c0_i32_1 = arith.constant 0 : i32
    return %arg0, %c0_i32, %c0_i32_0 : i32, i32, i32
  }
}

</mosaic_0001>

<llo_original>
// kernel: mul.40
$region0: #{mul.40}
  %s0 = inlined_call_operand.hbm [shape: f32[8,3,3,4], index: 0, kind: input, shape index: {}]
  %s1 = inlined_call_operand.vmem [shape: f32[8,36], index: 1, kind: output, shape index: {}]
  $region1: #{mul.40} parent=0
    #allocation0 [shape = 'u8[18432]{0}', space=vmem, size = 0x4800, scoped, tag = 'operand span for operand 0']
    #allocation1 [shape = 's32[1]{0}', space=sflag, size = 0x4, scoped, tag = 'scoped memory for mul.40']
    #allocation2 [shape = 'u8[36864]{0}', space=vmem, size = 0x9000, scoped, tag = 'scoped mem for input reshape']
    %2 = vsyncpa [#allocation1], 0
    %s4 = ssub.s32 576, 576
    %5 = vsyncadd [#allocation1], %s4
    %s7 = sshll.u32 [#allocation0], 4
    %s8 = int_to_ptr.vmem [resolvable:$true] %s7
    %10 = dma.hbm_to_vmem [thread:$0]  %s0, 576, %s8, [#allocation1]
    %11 = dma.done [#allocation1], 576
    %s13 = sshll.u32 1, 4
    %s14 = ssub.s32 %s13, 1
    %s15 = smul.addr 4, 8
    %s16 = scalar_lea.vmem [#allocation0], %s15
    %v17 = vld [vmem:[%s16] sm:%s14]
    %s18 = scalar_lea.vmem [#allocation2], 64
    %19 = vst [vmem:[%s18] sm:%s14] %v17
    %s20 = smul.addr 4, 7
    %s21 = scalar_lea.vmem [#allocation0], %s20
    %v22 = vld [vmem:[%s21] sm:%s14]
    %s23 = scalar_lea.vmem [#allocation2], 56
    %24 = vst [vmem:[%s23] sm:%s14] %v22
    %s25 = smul.addr 4, 6
    %s26 = scalar_lea.vmem [#allocation0], %s25
    %v27 = vld [vmem:[%s26] sm:%s14]
    %s28 = scalar_lea.vmem [#allocation2], 48
    %29 = vst [vmem:[%s28] sm:%s14] %v27
    %s30 = smul.addr 4, 5
    %s31 = scalar_lea.vmem [#allocation0], %s30
    %v32 = vld [vmem:[%s31] sm:%s14]
    %s33 = scalar_lea.vmem [#allocation2], 40
    %34 = vst [vmem:[%s33] sm:%s14] %v32
    %s35 = smul.addr 4, 4
    %s36 = scalar_lea.vmem [#allocation0], %s35
    %v37 = vld [vmem:[%s36] sm:%s14]
    %s38 = scalar_lea.vmem [#allocation2], 32
    %39 = vst [vmem:[%s38] sm:%s14] %v37
    %s40 = smul.addr 4, 3
    %s41 = scalar_lea.vmem [#allocation0], %s40
    %v42 = vld [vmem:[%s41] sm:%s14]
    %s43 = scalar_lea.vmem [#allocation2], 24
    %44 = vst [vmem:[%s43] sm:%s14] %v42
    %s45 = smul.addr 4, 2
    %s46 = scalar_lea.vmem [#allocation0], %s45
    %v47 = vld [vmem:[%s46] sm:%s14]
    %s48 = scalar_lea.vmem [#allocation2], 16
    %49 = vst [vmem:[%s48] sm:%s14] %v47
    %s50 = scalar_lea.vmem [#allocation0], 4
    %v51 = vld [vmem:[%s50] sm:%s14]
    %s52 = scalar_lea.vmem [#allocation2], 8
    %53 = vst [vmem:[%s52] sm:%s14] %v51
    %v54 = vld [vmem:[#allocation0] sm:%s14]
    %55 = vst [vmem:[#allocation2] sm:%s14] %v54
    %v56 = vld [vmem:[#allocation2] sm:$0xf]
    %vm57 = vcmask 64512
    %58 = vst.msk [vmem:[%s1] sm:$0xf] %vm57, %v56
    %s59 = scalar_lea.vmem [#allocation2], 8
    %v60 = vld [vmem:[%s59] sm:$0xf]
    %vm61 = vcmask 64512
    %s62 = scalar_lea.vmem %s1, 4
    %63 = vst.msk [vmem:[%s62] sm:$0xf] %vm61, %v60
    %s64 = scalar_lea.vmem [#allocation2], 16
    %v65 = vld [vmem:[%s64] sm:$0xf]
    %vm66 = vcmask 64512
    %s67 = scalar_lea.vmem %s1, 8
    %68 = vst.msk [vmem:[%s67] sm:$0xf] %vm66, %v65
    %s69 = scalar_lea.vmem [#allocation2], 24
    %v70 = vld [vmem:[%s69] sm:$0xf]
    %vm71 = vcmask 64512
    %s72 = scalar_lea.vmem %s1, 12
    %73 = vst.msk [vmem:[%s72] sm:$0xf] %vm71, %v70
    %s74 = scalar_lea.vmem [#allocation2], 32
    %v75 = vld [vmem:[%s74] sm:$0xf]
    %vm76 = vcmask 64512
    %s77 = scalar_lea.vmem %s1, 16
    %78 = vst.msk [vmem:[%s77] sm:$0xf] %vm76, %v75
    %s79 = scalar_lea.vmem [#allocation2], 40
    %v80 = vld [vmem:[%s79] sm:$0xf]
    %vm81 = vcmask 64512
    %s82 = scalar_lea.vmem %s1, 20
    %83 = vst.msk [vmem:[%s82] sm:$0xf] %vm81, %v80
    %s84 = scalar_lea.vmem [#allocation2], 48
    %v85 = vld [vmem:[%s84] sm:$0xf]
    %vm86 = vcmask 64512
    %s87 = scalar_lea.vmem %s1, 24
    %88 = vst.msk [vmem:[%s87] sm:$0xf] %vm86, %v85
    %s89 = scalar_lea.vmem [#allocation2], 56
    %v90 = vld [vmem:[%s89] sm:$0xf]
    %vm91 = vcmask 64512
    %s92 = scalar_lea.vmem %s1, 28
    %93 = vst.msk [vmem:[%s92] sm:$0xf] %vm91, %v90
    %s94 = scalar_lea.vmem [#allocation2], 64
    %v95 = vld [vmem:[%s94] sm:$0xf]
    %vm96 = vcmask 64512
    %s97 = scalar_lea.vmem %s1, 32
    %98 = vst.msk [vmem:[%s97] sm:$0xf] %vm96, %v95
    %99 = vsyncpa [#allocation1], 1

// kernel: keepres_forward.1
$region0: #{keepres_forward.1}
  #allocation0 [shape = 'u32[]', space=smem, size = 0x4, offset = 0x4, fixed_abs, tag = 'smem constant byte address 0x4 - core index']
  #allocation1 [shape = 'u32[144,128]{1,0:T(1,128)}', space=vmem, size = 0x12000, scoped, tag = 'internal scratch']
  %s0 = inlined_call_operand.vmem [shape: f32[2,4,4,9,9], index: 0, kind: input, shape index: {}]
  %s1 = inlined_call_operand.vmem [shape: bf16[64,288], index: 1, kind: input, shape index: {}]
  %s2 = inlined_call_operand.vmem [shape: f32[64,1], index: 2, kind: input, shape index: {}]
  %s3 = inlined_call_operand.vmem [shape: bf16[8,16], index: 3, kind: input, shape index: {}]
  %s4 = inlined_call_operand.vmem [shape: bf16[128,64], index: 4, kind: input, shape index: {}]
  %s5 = inlined_call_operand.hbm [shape: f32[2,128,16], index: 5, kind: output, shape index: {}]
  %s6 = sld [smem:[#allocation0]]
  $region53: #{keepres_forward.1} parent=0
    _
  %s8 = ssub.s32 1, %s6
  %s9 = scalar_select 0, %s8, %s6
  $region1: #{keepres_forward.1} parent=0
    #allocation2 [shape = 'u8[131072]{0}', space=vmem, size = 0x20000, scoped, tag = 'output window, operand 0']
    #allocation3 [shape = 's32[2]{0}', space=sflag, size = 0x8, scoped, tag = 'scoped memory for keepres_forward.1']
    %10 = vsyncpa [#allocation3], 0
    %s11 = scalar_lea.sflag [#allocation3], 1
    %12 = vsyncpa %s11, 0
    loop: start=0, step=1, limit=4
    $region2: #{keepres_forward.1} parent=1 // loop_pre_header
      _
    $region3: #{keepres_forward.1} parent=1 // loop_header
      %s14 = sphi 0, %s18
      %p15 = scmp.ge.s32.totalorder %s14, 4
      %s24 = sphi 0, %s26
      %s27 = sphi 0, %s24
      %s28 = sphi 0, %s27
      %s44 = sphi 0, %s28
      %s48 = sphi 0, %s48
      %s50 = sphi 0, %s48
      %s51 = sphi 0, %s50
      %s65 = sphi 0, %s51
      %s69 = sphi 0, %s69
      %s71 = sphi 0, %s69
      %s72 = sphi 0, %s71
      %s86 = sphi 0, %s72
      %s90 = sphi 0, %s90
      %s92 = sphi 0, %s90
      %s93 = sphi 0, %s92
      %s107 = sphi 0, %s93
      %s111 = sphi 0, %s111
      %s113 = sphi 0, %s111
      %s114 = sphi 0, %s113
      %s128 = sphi 0, %s114
      %s134 = sphi 0, %s136
      %s137 = sphi 0, %s134
      %s138 = sphi 0, %s137
      %s154 = sphi 0, %s138
    $region4: #{keepres_forward.1} parent=1 // loop_header_branch
      %17 = sbr.rel (%p15) target = $region8
    $region5: #{keepres_forward.1} parent=1 // loop_body
      %s19 = ssub.s32 %s14, 1
      %s20 = ssub.s32 %s14, 2
      %s21 = sadd.s32 %s14, 1
      %s22 = ssub.s32 %s14, %s21
      %p23 = scmp.eq.s32.totalorder %s22, 0
      %s25 = sadd.s32 %s24, 1
      %s26 = scalar_select %p23, %s24, %s25
      %p29 = pneg %p23
      %p30 = scmp.eq.s32.totalorder %s14, 1
      %p31 = por %p29, %p30
      %p32 = scmp.ne.s32.totalorder %s24, %s27
      %p33 = scmp.eq.s32.totalorder %s14, 0
      %p34 = por %p32, %p33
      %p35 = scmp.ne.s32.totalorder %s24, %s27
      %p36 = scmp.eq.s32.totalorder %s19, 1
      %p37 = por %p35, %p36
      %p38 = scmp.ne.s32.totalorder %s27, %s28
      %p39 = scmp.eq.s32.totalorder %s19, 0
      %p40 = por %p38, %p39
      %p41 = scmp.ne.s32.totalorder %s27, %s28
      %p42 = scmp.eq.s32.totalorder %s20, 1
      %p43 = por %p41, %p42
      %p45 = scmp.ne.s32.totalorder %s28, %s44
      %p46 = scmp.eq.s32.totalorder %s20, 0
      %p47 = por %p45, %p46
      %s49 = sadd.s32 %s48, 1
      %p52 = scmp.eq.s32.totalorder %s14, 1
      %p53 = scmp.ne.s32.totalorder %s48, %s50
      %p54 = scmp.eq.s32.totalorder %s14, 0
      %p55 = por %p53, %p54
      %p56 = scmp.ne.s32.totalorder %s48, %s50
      %p57 = scmp.eq.s32.totalorder %s19, 1
      %p58 = por %p56, %p57
      %p59 = scmp.ne.s32.totalorder %s50, %s51
      %p60 = scmp.eq.s32.totalorder %s19, 0
      %p61 = por %p59, %p60
      %p62 = scmp.ne.s32.totalorder %s50, %s51
      %p63 = scmp.eq.s32.totalorder %s20, 1
      %p64 = por %p62, %p63
      %p66 = scmp.ne.s32.totalorder %s51, %s65
      %p67 = scmp.eq.s32.totalorder %s20, 0
      %p68 = por %p66, %p67
      %s70 = sadd.s32 %s69, 1
      %p73 = scmp.eq.s32.totalorder %s14, 1
      %p74 = scmp.ne.s32.totalorder %s69, %s71
      %p75 = scmp.eq.s32.totalorder %s14, 0
      %p76 = por %p74, %p75
      %p77 = scmp.ne.s32.totalorder %s69, %s71
      %p78 = scmp.eq.s32.totalorder %s19, 1
      %p79 = por %p77, %p78
      %p80 = scmp.ne.s32.totalorder %s71, %s72
      %p81 = scmp.eq.s32.totalorder %s19, 0
      %p82 = por %p80, %p81
      %p83 = scmp.ne.s32.totalorder %s71, %s72
      %p84 = scmp.eq.s32.totalorder %s20, 1
      %p85 = por %p83, %p84
      %p87 = scmp.ne.s32.totalorder %s72, %s86
      %p88 = scmp.eq.s32.totalorder %s20, 0
      %p89 = por %p87, %p88
      %s91 = sadd.s32 %s90, 1
      %p94 = scmp.eq.s32.totalorder %s14, 1
      %p95 = scmp.ne.s32.totalorder %s90, %s92
      %p96 = scmp.eq.s32.totalorder %s14, 0
      %p97 = por %p95, %p96
      %p98 = scmp.ne.s32.totalorder %s90, %s92
      %p99 = scmp.eq.s32.totalorder %s19, 1
      %p100 = por %p98, %p99
      %p101 = scmp.ne.s32.totalorder %s92, %s93
      %p102 = scmp.eq.s32.totalorder %s19, 0
      %p103 = por %p101, %p102
      %p104 = scmp.ne.s32.totalorder %s92, %s93
      %p105 = scmp.eq.s32.totalorder %s20, 1
      %p106 = por %p104, %p105
      %p108 = scmp.ne.s32.totalorder %s93, %s107
      %p109 = scmp.eq.s32.totalorder %s20, 0
      %p110 = por %p108, %p109
      %s112 = sadd.s32 %s111, 1
      %p115 = scmp.eq.s32.totalorder %s14, 1
      %p116 = scmp.ne.s32.totalorder %s111, %s113
      %p117 = scmp.eq.s32.totalorder %s14, 0
      %p118 = por %p116, %p117
      %p119 = scmp.ne.s32.totalorder %s111, %s113
      %p120 = scmp.eq.s32.totalorder %s19, 1
      %p121 = por %p119, %p120
      %p122 = scmp.ne.s32.totalorder %s113, %s114
      %p123 = scmp.eq.s32.totalorder %s19, 0
      %p124 = por %p122, %p123
      %p125 = scmp.ne.s32.totalorder %s113, %s114
      %p126 = scmp.eq.s32.totalorder %s20, 1
      %p127 = por %p125, %p126
      %p129 = scmp.ne.s32.totalorder %s114, %s128
      %p130 = scmp.eq.s32.totalorder %s20, 0
      %p131 = por %p129, %p130
      %s132 = ssub.s32 %s14, %s21
      %p133 = scmp.eq.s32.totalorder %s132, 0
      %s135 = sadd.s32 %s134, 1
      %s136 = scalar_select %p133, %s134, %s135
      %p139 = pneg %p133
      %p140 = scmp.eq.s32.totalorder %s14, 1
      %p141 = por %p139, %p140
      %p142 = scmp.ne.s32.totalorder %s134, %s137
      %p143 = scmp.eq.s32.totalorder %s14, 0
      %p144 = por %p142, %p143
      %p145 = scmp.ne.s32.totalorder %s134, %s137
      %p146 = scmp.eq.s32.totalorder %s19, 1
      %p147 = por %p145, %p146
      %p148 = scmp.ne.s32.totalorder %s137, %s138
      %p149 = scmp.eq.s32.totalorder %s19, 0
      %p150 = por %p148, %p149
      %p151 = scmp.ne.s32.totalorder %s137, %s138
      %p152 = scmp.eq.s32.totalorder %s20, 1
      %p153 = por %p151, %p152
      %p155 = scmp.ne.s32.totalorder %s138, %s154
      %p156 = scmp.eq.s32.totalorder %s20, 0
      %p157 = por %p155, %p156
      %p158 = scmp.le.s32.totalorder 1, %s14
      %p159 = scmp.lt.s32.totalorder %s14, 3
      %p160 = pnand %p158, %p159
      %p161 = pneg %p160
      // Predicated region
      $region9: #{keepres_forward.1} parent=5 // pred_check
        _
      $region10: #{keepres_forward.1} parent=5 // pred_check_branch
        %163 = sbr.rel (%p160) target = $region12
      $region11: #{keepres_forward.1} parent=5 // pred_region
        %s164 = ssub.s32 %s14, 1
        // Predicated region
        $region13: #{keepres_forward.1} parent=11 // pred_check
          %p165 = pneg %p61
        $region14: #{keepres_forward.1} parent=11 // pred_check_branch
          %167 = sbr.rel (%p165) target = $region16
        $region15: #{keepres_forward.1} parent=11 // pred_region
          _
        $region16: #{keepres_forward.1} parent=11 // pred_fallthru
          _
        // Predicated region
        $region17: #{keepres_forward.1} parent=11 // pred_check
          %p168 = pneg %p82
        $region18: #{keepres_forward.1} parent=11 // pred_check_branch
          %170 = sbr.rel (%p168) target = $region20
        $region19: #{keepres_forward.1} parent=11 // pred_region
          _
        $region20: #{keepres_forward.1} parent=11 // pred_fallthru
          _
        // Predicated region
        $region21: #{keepres_forward.1} parent=11 // pred_check
          %p171 = pneg %p103
        $region22: #{keepres_forward.1} parent=11 // pred_check_branch
          %173 = sbr.rel (%p171) target = $region24
        $region23: #{keepres_forward.1} parent=11 // pred_region
          _
        $region24: #{keepres_forward.1} parent=11 // pred_fallthru
          _
        // Predicated region
        $region25: #{keepres_forward.1} parent=11 // pred_check
          %p174 = pneg %p124
        $region26: #{keepres_forward.1} parent=11 // pred_check_branch
          %176 = sbr.rel (%p174) target = $region28
        $region27: #{keepres_forward.1} parent=11 // pred_region
          _
        $region28: #{keepres_forward.1} parent=11 // pred_fallthru
          _
      $region12: #{keepres_forward.1} parent=5 // pred_fallthru
        _
      %p177 = scmp.lt.s32.totalorder %s14, 2
      // Predicated region
      $region29: #{keepres_forward.1} parent=5 // pred_check
        %p178 = pneg %p177
      $region30: #{keepres_forward.1} parent=5 // pred_check_branch
        %180 = sbr.rel (%p178) target = $region32
      $region31: #{keepres_forward.1} parent=5 // pred_region
        // Predicated region
        $region33: #{keepres_forward.1} parent=31 // pred_check
          %p181 = pneg %p34
        $region34: #{keepres_forward.1} parent=31 // pred_check_branch
          %183 = sbr.rel (%p181) target = $region36
        $region35: #{keepres_forward.1} parent=31 // pred_region
          %p184 = scmp.lt.s32.totalorder %s14, 1
          %s185 = scalar_select %p184, %s14, 1
          %s186 = smul.addr %s185, 32
          %s187 = smul.addr %s186, 8
          %s188 = scalar_lea.vmem %s0, %s187
        $region36: #{keepres_forward.1} parent=31 // pred_fallthru
          _
      $region32: #{keepres_forward.1} parent=5 // pred_fallthru
        _
      %p189 = scmp.le.s32.totalorder 1, %s14
      %p190 = scmp.lt.s32.totalorder %s14, 3
      %p191 = pnand %p189, %p190
      %p192 = pneg %p191
      // Predicated region
      $region37: #{keepres_forward.1} parent=5 // pred_check
        _
      $region38: #{keepres_forward.1} parent=5 // pred_check_branch
        %194 = sbr.rel (%p191) target = $region40
      $region39: #{keepres_forward.1} parent=5 // pred_region
        %s195 = ssub.s32 %s14, 1
        %p196 = scmp.lt.s32.totalorder %s19, 1
        %s197 = scalar_select %p196, %s19, 1
        %s198 = smul.addr %s197, 32
        %s199 = smul.addr %s198, 8
        %s200 = scalar_lea.vmem %s0, %s199
        %p201 = pneg %p40
        %p202 = pneg %p37
        %p203 = pneg %p61
        %p204 = pneg %p58
        %p205 = pneg %p82
        %p206 = pneg %p79
        %p207 = pneg %p103
        %p208 = pneg %p100
        %p209 = pneg %p124
        %p210 = pneg %p121
        %p211 = pneg %p150
        %p212 = pneg %p147
        %s213 = sand.u32 %s137, 1
        %s214 = scalar_lea.sflag [#allocation3], %s213
        %s215 = sand.u32 %s137, 1
        %s216 = smul.addr %s215, 128
        %s217 = scalar_lea.vmem [#allocation2], %s216
        %p218 = scmp.lt.s32.totalorder %s19, 1
        %s219 = scalar_select %p218, %s19, 1
        %s220 = smul.addr %s219, 32
        %s221 = smul.addr %s220, 8
        %s222 = scalar_lea.vmem %s0, %s221
        %v224 = vld [vmem:[%s222] sm:$0xff]
        %s225 = scalar_lea.vmem %s222, 16
        %v226 = vld [vmem:[%s225] sm:$0xff]
        %s227 = scalar_lea.vmem %s222, 32
        %v228 = vld [vmem:[%s227] sm:$0xff]
        %s229 = scalar_lea.vmem %s222, 48
        %v230 = vld [vmem:[%s229] sm:$0xff]
        %s231 = scalar_lea.vmem %s222, 64
        %v232 = vld [vmem:[%s231] sm:$0xff]
        %s233 = scalar_lea.vmem %s222, 80
        %v234 = vld [vmem:[%s233] sm:$0xff]
        %s235 = scalar_lea.vmem %s222, 96
        %v236 = vld [vmem:[%s235] sm:$0xff]
        %s237 = scalar_lea.vmem %s222, 112
        %v238 = vld [vmem:[%s237] sm:$0xff]
        %s239 = scalar_lea.vmem %s222, 128
        %v240 = vld [vmem:[%s239] sm:$0xff]
        %s241 = scalar_lea.vmem %s222, 144
        %v242 = vld [vmem:[%s241] sm:$0xff]
        %s243 = scalar_lea.vmem %s222, 160
        %v244 = vld [vmem:[%s243] sm:$0xff]
        %s245 = scalar_lea.vmem %s222, 176
        %v246 = vld [vmem:[%s245] sm:$0xff]
        %s247 = scalar_lea.vmem %s222, 192
        %v248 = vld [vmem:[%s247] sm:$0xff]
        %s249 = scalar_lea.vmem %s222, 208
        %v250 = vld [vmem:[%s249] sm:$0xff]
        %s251 = scalar_lea.vmem %s222, 224
        %v252 = vld [vmem:[%s251] sm:$0xff]
        %s253 = scalar_lea.vmem %s222, 240
        %v254 = vld [vmem:[%s253] sm:$0xff]
        %v255 = vld [vmem:[%s222 + $0x1] sm:$0xff]
        %v256 = vld [vmem:[%s225 + $0x1] sm:$0xff]
        %v257 = vld [vmem:[%s227 + $0x1] sm:$0xff]
        %v258 = vld [vmem:[%s229 + $0x1] sm:$0xff]
        %v259 = vld [vmem:[%s231 + $0x1] sm:$0xff]
        %v260 = vld [vmem:[%s233 + $0x1] sm:$0xff]
        %v261 = vld [vmem:[%s235 + $0x1] sm:$0xff]
        %v262 = vld [vmem:[%s237 + $0x1] sm:$0xff]
        %264 = vrot.lane.b32.xlu0 %v224, 127
        %v265 = vpop.permute.xlu0 %264
        %268 = vrot.lane.b32.xlu0 %v226, 127
        %v269 = vpop.permute.xlu0 %268
        %272 = vrot.lane.b32.xlu0 %v228, 127
        %v273 = vpop.permute.xlu0 %272
        %276 = vrot.lane.b32.xlu0 %v230, 127
        %v277 = vpop.permute.xlu0 %276
        %280 = vrot.lane.b32.xlu0 %v240, 127
        %v281 = vpop.permute.xlu0 %280
        %284 = vrot.lane.b32.xlu0 %v242, 127
        %v285 = vpop.permute.xlu0 %284
        %288 = vrot.lane.b32.xlu0 %v244, 127
        %v289 = vpop.permute.xlu0 %288
        %292 = vrot.lane.b32.xlu0 %v246, 127
        %v293 = vpop.permute.xlu0 %292
        %299 = vrot.lane.b32.xlu0 %v255, 127
        %v300 = vpop.permute.xlu0 %299
        %301 = vrot.lane.b32.xlu0 %v256, 127
        %v302 = vpop.permute.xlu0 %301
        %303 = vrot.lane.b32.xlu0 %v257, 127
        %v304 = vpop.permute.xlu0 %303
        %305 = vrot.lane.b32.xlu0 %v258, 127
        %v306 = vpop.permute.xlu0 %305
        %v311 = vpack.c.bf16 %v226, %v224
        %v312 = vpack.c.bf16 %v230, %v228
        %v313 = vpack.c.bf16 %v234, %v232
        %v314 = vpack.c.bf16 %v238, %v236
        %v315 = vpack.c.bf16 %v269, %v265
        %v316 = vpack.c.bf16 %v277, %v273
        %v317 = vpack.c.bf16 %v242, %v240
        %v318 = vpack.c.bf16 %v246, %v244
        %v319 = vpack.c.bf16 %v250, %v248
        %v320 = vpack.c.bf16 %v254, %v252
        %v321 = vpack.c.bf16 %v285, %v281
        %v322 = vpack.c.bf16 %v293, %v289
        %v323 = vpack.c.bf16 %v256, %v255
        %v324 = vpack.c.bf16 %v258, %v257
        %v325 = vpack.c.bf16 %v260, %v259
        %v326 = vpack.c.bf16 %v262, %v261
        %v327 = vpack.c.bf16 %v302, %v300
        %v328 = vpack.c.bf16 %v306, %v304
        %v329 = vld [vmem:[%s1] sm:$0xff]
        %v330 = vld [vmem:[%s1 + $0x8] sm:$0xf]
        %v331 = vld [vmem:[%s1 + $0xc] sm:$0xff]
        %v332 = vld [vmem:[%s1 + $0x14] sm:$0xf]
        %v333 = vld [vmem:[%s1 + $0x18] sm:$0xff]
        %v334 = vld [vmem:[%s1 + $0x20] sm:$0xf]
        %v335 = vld [vmem:[%s1 + $0x24] sm:$0xff]
        %v336 = vld [vmem:[%s1 + $0x2c] sm:$0xf]
        %v337 = vld [vmem:[%s1 + $0x30] sm:$0xff]
        %v338 = vld [vmem:[%s1 + $0x38] sm:$0xf]
        %v339 = vld [vmem:[%s1 + $0x3c] sm:$0xff]
        %v340 = vld [vmem:[%s1 + $0x44] sm:$0xf]
        %v341 = vld [vmem:[%s1 + $0x48] sm:$0xff]
        %v342 = vld [vmem:[%s1 + $0x50] sm:$0xf]
        %v343 = vld [vmem:[%s1 + $0x54] sm:$0xff]
        %v344 = vld [vmem:[%s1 + $0x5c] sm:$0xf]
        %v345 = vld [vmem:[%s2] sm:$0xff]
        %v346 = vld [vmem:[%s2 + $0x8] sm:$0xff]
        %v347 = vld [vmem:[%s2 + $0x10] sm:$0xff]
        %v348 = vld [vmem:[%s2 + $0x18] sm:$0xff]
        %v349 = vld [vmem:[%s2 + $0x20] sm:$0xff]
        %v350 = vld [vmem:[%s2 + $0x28] sm:$0xff]
        %v351 = vld [vmem:[%s2 + $0x30] sm:$0xff]
        %v352 = vld [vmem:[%s2 + $0x38] sm:$0xff]
        %354 = vset.pattern.permute.xlu0 0
        %355 = vperm.xlu0 %354, %v345
        %v356 = vpop.permute.xlu0 %355
        %359 = vset.pattern.permute.xlu0 0
        %360 = vperm.xlu0 %359, %v346
        %v361 = vpop.permute.xlu0 %360
        %364 = vset.pattern.permute.xlu0 0
        %365 = vperm.xlu0 %364, %v347
        %v366 = vpop.permute.xlu0 %365
        %369 = vset.pattern.permute.xlu0 0
        %370 = vperm.xlu0 %369, %v348
        %v371 = vpop.permute.xlu0 %370
        %374 = vset.pattern.permute.xlu0 0
        %375 = vperm.xlu0 %374, %v349
        %v376 = vpop.permute.xlu0 %375
        %379 = vset.pattern.permute.xlu0 0
        %380 = vperm.xlu0 %379, %v350
        %v381 = vpop.permute.xlu0 %380
        %384 = vset.pattern.permute.xlu0 0
        %385 = vperm.xlu0 %384, %v351
        %v386 = vpop.permute.xlu0 %385
        %389 = vset.pattern.permute.xlu0 0
        %390 = vperm.xlu0 %389, %v352
        %v391 = vpop.permute.xlu0 %390
        %v409 = vunpack.c.l.b16 %v329
        %v410 = vunpack.c.h.b16 %v329
        %v411 = vunpack.c.l.b16 %v330
        %v412 = vunpack.c.l.b16 %v331
        %v413 = vunpack.c.h.b16 %v331
        %v414 = vunpack.c.l.b16 %v332
        %v415 = vunpack.c.l.b16 %v333
        %v416 = vunpack.c.h.b16 %v333
        %v417 = vunpack.c.l.b16 %v334
        %v418 = vunpack.c.l.b16 %v335
        %v419 = vunpack.c.h.b16 %v335
        %v420 = vunpack.c.l.b16 %v336
        %v421 = vunpack.c.l.b16 %v337
        %v422 = vunpack.c.h.b16 %v337
        %v423 = vunpack.c.l.b16 %v338
        %v424 = vunpack.c.l.b16 %v339
        %v425 = vunpack.c.h.b16 %v339
        %v426 = vunpack.c.l.b16 %v340
        %v427 = vunpack.c.l.b16 %v341
        %v428 = vunpack.c.h.b16 %v341
        %v429 = vunpack.c.l.b16 %v342
        %v430 = vunpack.c.l.b16 %v343
        %v431 = vunpack.c.h.b16 %v343
        %v432 = vunpack.c.l.b16 %v344
        %v433 = vpack.c.b16 %v412, %v409
        %v434 = vpack.c.b16 %v413, %v410
        %v435 = vpack.c.b16 %v414, %v411
        %v436 = vpack.c.b16 %v418, %v415
        %v437 = vpack.c.b16 %v419, %v416
        %v438 = vpack.c.b16 %v420, %v417
        %v439 = vpack.c.b16 %v424, %v421
        %v440 = vpack.c.b16 %v425, %v422
        %v441 = vpack.c.b16 %v426, %v423
        %v442 = vpack.c.b16 %v430, %v427
        %v443 = vpack.c.b16 %v431, %v428
        %v444 = vpack.c.b16 %v432, %v429
        %vm453 = vcmask 261120
        %v455 = vsel %vm453, %v435, 0
        %v458 = vsel %vm453, %v438, 0
        %v461 = vsel %vm453, %v441, 0
        %v464 = vsel %vm453, %v444, 0
        %466 = vmatprep.subr.bf16.mxu0 0
        %467 = vmatpush1.bf16.msra.mxu0 %v318
        %468 = vmatprep.subr.bf16.mxu0 0
        %469 = vmatpush1.bf16.msra.mxu0 %v317
        %470 = vmatprep.subr.bf16.mxu0 0
        %471 = vmatpush1.bf16.msra.mxu0 %v316
        %472 = vmatprep.subr.bf16.mxu0 0
        %473 = vmatpush1.bf16.msra.mxu0 %v315
        %474 = vmatprep.subr.bf16.mxu0 0
        %475 = vmatpush1.bf16.msra.mxu0 %v314
        %476 = vmatprep.subr.bf16.mxu0 0
        %477 = vmatpush1.bf16.msra.mxu0 %v313
        %478 = vmatprep.subr.bf16.mxu0 0
        %479 = vmatpush1.bf16.msra.mxu0 %v312
        %480 = vmatprep.subr.bf16.mxu0 0
        %481 = vmatpush1.bf16.msra.mxu0 %v311
        %482 = vmatprep.subr.bf16.mxu0 0
        %483 = vmatpush2.bf16.msra.mxu0 %v326
        %484 = vmatprep.subr.bf16.mxu0 0
        %485 = vmatpush2.bf16.msra.mxu0 %v325
        %486 = vmatprep.subr.bf16.mxu0 0
        %487 = vmatpush2.bf16.msra.mxu0 %v324
        %488 = vmatprep.subr.bf16.mxu0 0
        %489 = vmatpush2.bf16.msra.mxu0 %v323
        %490 = vmatprep.subr.bf16.mxu0 0
        %491 = vmatpush2.bf16.msra.mxu0 %v322
        %492 = vmatprep.subr.bf16.mxu0 0
        %493 = vmatpush2.bf16.msra.mxu0 %v321
        %494 = vmatprep.subr.bf16.mxu0 0
        %495 = vmatpush2.bf16.msra.mxu0 %v320
        %496 = vmatprep.subr.bf16.mxu0 0
        %497 = vmatpush2.bf16.msra.mxu0 %v319
        %498 = vmatprep.mubr.bf16.mxu0 %v434
        %499 = vmatmul.mubr.bf16.gmra.mxu0 %v433
        %v500 = vpop.f32.mrf.mxu0
        %v501 = vadd.f32 %v356, %v500
        %v502 = vpop.f32.mrf.mxu0
        %v503 = vpop.f32.mrf.mxu0
        %v504 = vadd.f32 %v361, %v503
        %v505 = vpop.f32.mrf.mxu0
        %506 = vmatprep.mubr.bf16.mxu0 %v437
        %507 = vmatmul.mubr.bf16.gmra.mxu0 %v436
        %v508 = vpop.f32.mrf.mxu0
        %v509 = vadd.f32 %v366, %v508
        %v510 = vpop.f32.mrf.mxu0
        %v511 = vpop.f32.mrf.mxu0
        %v512 = vadd.f32 %v371, %v511
        %v513 = vpop.f32.mrf.mxu0
        %514 = vmatprep.mubr.bf16.mxu0 %v440
        %515 = vmatmul.mubr.bf16.gmra.mxu0 %v439
        %v516 = vpop.f32.mrf.mxu0
        %v517 = vadd.f32 %v376, %v516
        %v518 = vpop.f32.mrf.mxu0
        %v519 = vpop.f32.mrf.mxu0
        %v520 = vadd.f32 %v381, %v519
        %v521 = vpop.f32.mrf.mxu0
        %522 = vmatprep.mubr.bf16.mxu0 %v443
        %523 = vmatmul.mubr.bf16.gmra.mxu0 %v442
        %v524 = vpop.f32.mrf.mxu0
        %v525 = vadd.f32 %v386, %v524
        %v526 = vpop.f32.mrf.mxu0
        %v527 = vpop.f32.mrf.mxu0
        %v528 = vadd.f32 %v391, %v527
        %v529 = vpop.f32.mrf.mxu0
        %530 = vdwg.mxu0
        %531 = vmatprep.subr.bf16.mxu0 0
        %532 = vmatpush1.bf16.msra.mxu0 0
        %533 = vmatprep.subr.bf16.mxu0 0
        %534 = vmatpush1.bf16.msra.mxu0 0
        %535 = vmatprep.subr.bf16.mxu0 0
        %536 = vmatpush1.bf16.msra.mxu0 0
        %537 = vmatprep.subr.bf16.mxu0 0
        %538 = vmatpush1.bf16.msra.mxu0 0
        %539 = vmatprep.subr.bf16.mxu0 0
        %540 = vmatpush1.bf16.msra.mxu0 0
        %541 = vmatprep.subr.bf16.mxu0 0
        %542 = vmatpush1.bf16.msra.mxu0 0
        %543 = vmatprep.subr.bf16.mxu0 0
        %544 = vmatpush1.bf16.msra.mxu0 %v328
        %545 = vmatprep.subr.bf16.mxu0 0
        %546 = vmatpush1.bf16.msra.mxu0 %v327
        %547 = vmatprep.subr.bf16.mxu0 0
        %548 = vmatpush2.bf16.msra.mxu0 0
        %549 = vmatprep.subr.bf16.mxu0 0
        %550 = vmatpush2.bf16.msra.mxu0 0
        %551 = vmatprep.subr.bf16.mxu0 0
        %552 = vmatpush2.bf16.msra.mxu0 0
        %553 = vmatprep.subr.bf16.mxu0 0
        %554 = vmatpush2.bf16.msra.mxu0 0
        %555 = vmatprep.subr.bf16.mxu0 0
        %556 = vmatpush2.bf16.msra.mxu0 0
        %557 = vmatprep.subr.bf16.mxu0 0
        %558 = vmatpush2.bf16.msra.mxu0 0
        %559 = vmatprep.subr.bf16.mxu0 0
        %560 = vmatpush2.bf16.msra.mxu0 0
        %561 = vmatprep.subr.bf16.mxu0 0
        %562 = vmatpush2.bf16.msra.mxu0 0
        %563 = vmatprep.mubr.bf16.mxu0 0
        %564 = vmatmul.mubr.bf16.gmra.mxu0 %v455
        %v565 = vpop.f32.mrf.mxu0
        %v566 = vadd.f32 %v501, %v565
        %v567 = vpop.f32.mrf.mxu0
        %v568 = vpop.f32.mrf.mxu0
        %v569 = vadd.f32 %v504, %v568
        %v570 = vpop.f32.mrf.mxu0
        %571 = vmatprep.mubr.bf16.mxu0 0
        %572 = vmatmul.mubr.bf16.gmra.mxu0 %v458
        %v573 = vpop.f32.mrf.mxu0
        %v574 = vadd.f32 %v509, %v573
        %v575 = vpop.f32.mrf.mxu0
        %v576 = vpop.f32.mrf.mxu0
        %v577 = vadd.f32 %v512, %v576
        %v578 = vpop.f32.mrf.mxu0
        %579 = vmatprep.mubr.bf16.mxu0 0
        %580 = vmatmul.mubr.bf16.gmra.mxu0 %v461
        %v581 = vpop.f32.mrf.mxu0
        %v582 = vadd.f32 %v517, %v581
        %v583 = vpop.f32.mrf.mxu0
        %v584 = vpop.f32.mrf.mxu0
        %v585 = vadd.f32 %v520, %v584
        %v586 = vpop.f32.mrf.mxu0
        %587 = vmatprep.mubr.bf16.mxu0 0
        %588 = vmatmul.mubr.bf16.gmra.mxu0 %v464
        %v589 = vpop.f32.mrf.mxu0
        %v590 = vadd.f32 %v525, %v589
        %v591 = vpop.f32.mrf.mxu0
        %v592 = vpop.f32.mrf.mxu0
        %v593 = vadd.f32 %v528, %v592
        %v594 = vpop.f32.mrf.mxu0
        %595 = vdwg.mxu0
        %v596 = vmax.f32 %v566, 0.0
        %v597 = vmax.f32 %v569, 0.0
        %v598 = vmax.f32 %v574, 0.0
        %v599 = vmax.f32 %v577, 0.0
        %v600 = vmax.f32 %v582, 0.0
        %v601 = vmax.f32 %v585, 0.0
        %v602 = vmax.f32 %v590, 0.0
        %v603 = vmax.f32 %v593, 0.0
        %v604 = vpack.c.bf16 %v597, %v596
        %v605 = vpack.c.bf16 %v599, %v598
        %v606 = vpack.c.bf16 %v601, %v600
        %v607 = vpack.c.bf16 %v603, %v602
        %v608 = vld [vmem:[%s3] sm:$0xf]
        %vm609 = vcmask 64512
        %v611 = vsel %vm609, %v604, 0
        %v614 = vsel %vm609, %v605, 0
        %v617 = vsel %vm609, %v606, 0
        %v620 = vsel %vm609, %v607, 0
        %vm622 = vcmask 1043456
        %v624 = vsel %vm622, %v608, 0
        %626 = vmatprep.subr.bf16.mxu0 0
        %627 = vmatpush1.bf16.msra.mxu0 0
        %628 = vmatprep.subr.bf16.mxu0 0
        %629 = vmatpush1.bf16.msra.mxu0 0
        %630 = vmatprep.subr.bf16.mxu0 0
        %631 = vmatpush1.bf16.msra.mxu0 0
        %632 = vmatprep.subr.bf16.mxu0 0
        %633 = vmatpush1.bf16.msra.mxu0 0
        %634 = vmatprep.subr.bf16.mxu0 0
        %635 = vmatpush1.bf16.msra.mxu0 0
        %636 = vmatprep.subr.bf16.mxu0 0
        %637 = vmatpush1.bf16.msra.mxu0 0
        %638 = vmatprep.subr.bf16.mxu0 0
        %639 = vmatpush1.bf16.msra.mxu0 0
        %640 = vmatprep.subr.bf16.mxu0 0
        %641 = vmatpush1.bf16.msra.mxu0 %v624
        %642 = vmatprep.subr.bf16.mxu0 0
        %643 = vmatpush2.bf16.msra.mxu0 0
        %644 = vmatprep.subr.bf16.mxu0 0
        %645 = vmatpush2.bf16.msra.mxu0 0
        %646 = vmatprep.subr.bf16.mxu0 0
        %647 = vmatpush2.bf16.msra.mxu0 0
        %648 = vmatprep.subr.bf16.mxu0 0
        %649 = vmatpush2.bf16.msra.mxu0 0
        %650 = vmatprep.subr.bf16.mxu0 0
        %651 = vmatpush2.bf16.msra.mxu0 0
        %652 = vmatprep.subr.bf16.mxu0 0
        %653 = vmatpush2.bf16.msra.mxu0 0
        %654 = vmatprep.subr.bf16.mxu0 0
        %655 = vmatpush2.bf16.msra.mxu0 0
        %656 = vmatprep.subr.bf16.mxu0 0
        %657 = vmatpush2.bf16.msra.mxu0 0
        %658 = vmatprep.mubr.bf16.mxu0 0
        %659 = vmatmul.mubr.bf16.gmra.mxu0 %v611
        %v660 = vpop.f32.mrf.mxu0
        %v661 = vadd.f32 0.0, %v660
        %v662 = vpop.f32.mrf.mxu0
        %v663 = vpop.f32.mrf.mxu0
        %v664 = vadd.f32 0.0, %v663
        %v665 = vpop.f32.mrf.mxu0
        %666 = vmatprep.mubr.bf16.mxu0 0
        %667 = vmatmul.mubr.bf16.gmra.mxu0 %v614
        %v668 = vpop.f32.mrf.mxu0
        %v669 = vadd.f32 0.0, %v668
        %v670 = vpop.f32.mrf.mxu0
        %v671 = vpop.f32.mrf.mxu0
        %v672 = vadd.f32 0.0, %v671
        %v673 = vpop.f32.mrf.mxu0
        %674 = vmatprep.mubr.bf16.mxu0 0
        %675 = vmatmul.mubr.bf16.gmra.mxu0 %v617
        %v676 = vpop.f32.mrf.mxu0
        %v677 = vadd.f32 0.0, %v676
        %v678 = vpop.f32.mrf.mxu0
        %v679 = vpop.f32.mrf.mxu0
        %v680 = vadd.f32 0.0, %v679
        %v681 = vpop.f32.mrf.mxu0
        %682 = vmatprep.mubr.bf16.mxu0 0
        %683 = vmatmul.mubr.bf16.gmra.mxu0 %v620
        %v684 = vpop.f32.mrf.mxu0
        %v685 = vadd.f32 0.0, %v684
        %v686 = vpop.f32.mrf.mxu0
        %v687 = vpop.f32.mrf.mxu0
        %v688 = vadd.f32 0.0, %v687
        %v689 = vpop.f32.mrf.mxu0
        %690 = vdwg.mxu0
        %v691 = vld [vmem:[%s4] sm:$0xf]
        %v692 = vld [vmem:[%s4 + $0x4] sm:$0xf]
        %v693 = vld [vmem:[%s4 + $0x8] sm:$0xf]
        %v694 = vld [vmem:[%s4 + $0xc] sm:$0xf]
        %v695 = vld [vmem:[%s4 + $0x10] sm:$0xf]
        %v696 = vld [vmem:[%s4 + $0x14] sm:$0xf]
        %v697 = vld [vmem:[%s4 + $0x18] sm:$0xf]
        %v698 = vld [vmem:[%s4 + $0x1c] sm:$0xf]
        %v699 = vld [vmem:[%s4 + $0x20] sm:$0xf]
        %v700 = vld [vmem:[%s4 + $0x24] sm:$0xf]
        %v701 = vld [vmem:[%s4 + $0x28] sm:$0xf]
        %v702 = vld [vmem:[%s4 + $0x2c] sm:$0xf]
        %v703 = vld [vmem:[%s4 + $0x30] sm:$0xf]
        %v704 = vld [vmem:[%s4 + $0x34] sm:$0xf]
        %v705 = vld [vmem:[%s4 + $0x38] sm:$0xf]
        %v706 = vld [vmem:[%s4 + $0x3c] sm:$0xf]
        %v707 = vpack.c.bf16 %v664, %v661
        %v708 = vpack.c.bf16 %v672, %v669
        %v709 = vpack.c.bf16 %v680, %v677
        %v710 = vpack.c.bf16 %v688, %v685
        %v727 = vunpack.c.l.b16 %v691
        %v728 = vunpack.c.l.b16 %v692
        %v729 = vunpack.c.l.b16 %v693
        %v730 = vunpack.c.l.b16 %v694
        %v731 = vunpack.c.l.b16 %v695
        %v732 = vunpack.c.l.b16 %v696
        %v733 = vunpack.c.l.b16 %v697
        %v734 = vunpack.c.l.b16 %v698
        %v735 = vunpack.c.l.b16 %v699
        %v736 = vunpack.c.l.b16 %v700
        %v737 = vunpack.c.l.b16 %v701
        %v738 = vunpack.c.l.b16 %v702
        %v739 = vunpack.c.l.b16 %v703
        %v740 = vunpack.c.l.b16 %v704
        %v741 = vunpack.c.l.b16 %v705
        %v742 = vunpack.c.l.b16 %v706
        %v743 = vpack.c.b16 %v728, %v727
        %v744 = vpack.c.b16 %v730, %v729
        %v745 = vpack.c.b16 %v732, %v731
        %v746 = vpack.c.b16 %v734, %v733
        %v747 = vpack.c.b16 %v736, %v735
        %v748 = vpack.c.b16 %v738, %v737
        %v749 = vpack.c.b16 %v740, %v739
        %v750 = vpack.c.b16 %v742, %v741
        %vm751 = vcmask 523264
        %v753 = vsel %vm751, %v743, 0
        %v756 = vsel %vm751, %v744, 0
        %v759 = vsel %vm751, %v745, 0
        %v762 = vsel %vm751, %v746, 0
        %v765 = vsel %vm751, %v747, 0
        %v768 = vsel %vm751, %v748, 0
        %v771 = vsel %vm751, %v749, 0
        %v774 = vsel %vm751, %v750, 0
        %776 = vmatprep.subr.bf16.mxu0 0
        %777 = vmatpush1.bf16.msra.mxu0 0
        %778 = vmatprep.subr.bf16.mxu0 0
        %779 = vmatpush1.bf16.msra.mxu0 0
        %780 = vmatprep.subr.bf16.mxu0 0
        %781 = vmatpush1.bf16.msra.mxu0 0
        %782 = vmatprep.subr.bf16.mxu0 0
        %783 = vmatpush1.bf16.msra.mxu0 0
        %784 = vmatprep.subr.bf16.mxu0 0
        %785 = vmatpush1.bf16.msra.mxu0 %v710
        %786 = vmatprep.subr.bf16.mxu0 0
        %787 = vmatpush1.bf16.msra.mxu0 %v709
        %788 = vmatprep.subr.bf16.mxu0 0
        %789 = vmatpush1.bf16.msra.mxu0 %v708
        %790 = vmatprep.subr.bf16.mxu0 0
        %791 = vmatpush1.bf16.msra.mxu0 %v707
        %792 = vmatprep.subr.bf16.mxu0 0
        %793 = vmatpush2.bf16.msra.mxu0 0
        %794 = vmatprep.subr.bf16.mxu0 0
        %795 = vmatpush2.bf16.msra.mxu0 0
        %796 = vmatprep.subr.bf16.mxu0 0
        %797 = vmatpush2.bf16.msra.mxu0 0
        %798 = vmatprep.subr.bf16.mxu0 0
        %799 = vmatpush2.bf16.msra.mxu0 0
        %800 = vmatprep.subr.bf16.mxu0 0
        %801 = vmatpush2.bf16.msra.mxu0 0
        %802 = vmatprep.subr.bf16.mxu0 0
        %803 = vmatpush2.bf16.msra.mxu0 0
        %804 = vmatprep.subr.bf16.mxu0 0
        %805 = vmatpush2.bf16.msra.mxu0 0
        %806 = vmatprep.subr.bf16.mxu0 0
        %807 = vmatpush2.bf16.msra.mxu0 0
        %808 = vmatprep.mubr.bf16.mxu0 0
        %809 = vmatmul.mubr.bf16.gmra.mxu0 %v753
        %v810 = vpop.f32.mrf.mxu0
        %v811 = vadd.f32 0.0, %v810
        %v812 = vpop.f32.mrf.mxu0
        %v813 = vpop.f32.mrf.mxu0
        %v814 = vadd.f32 0.0, %v813
        %v815 = vpop.f32.mrf.mxu0
        %816 = vmatprep.mubr.bf16.mxu0 0
        %817 = vmatmul.mubr.bf16.gmra.mxu0 %v756
        %v818 = vpop.f32.mrf.mxu0
        %v819 = vadd.f32 0.0, %v818
        %v820 = vpop.f32.mrf.mxu0
        %v821 = vpop.f32.mrf.mxu0
        %v822 = vadd.f32 0.0, %v821
        %v823 = vpop.f32.mrf.mxu0
        %824 = vmatprep.mubr.bf16.mxu0 0
        %825 = vmatmul.mubr.bf16.gmra.mxu0 %v759
        %v826 = vpop.f32.mrf.mxu0
        %v827 = vadd.f32 0.0, %v826
        %v828 = vpop.f32.mrf.mxu0
        %v829 = vpop.f32.mrf.mxu0
        %v830 = vadd.f32 0.0, %v829
        %v831 = vpop.f32.mrf.mxu0
        %832 = vmatprep.mubr.bf16.mxu0 0
        %833 = vmatmul.mubr.bf16.gmra.mxu0 %v762
        %v834 = vpop.f32.mrf.mxu0
        %v835 = vadd.f32 0.0, %v834
        %v836 = vpop.f32.mrf.mxu0
        %v837 = vpop.f32.mrf.mxu0
        %v838 = vadd.f32 0.0, %v837
        %v839 = vpop.f32.mrf.mxu0
        %840 = vmatprep.mubr.bf16.mxu0 0
        %841 = vmatmul.mubr.bf16.gmra.mxu0 %v765
        %v842 = vpop.f32.mrf.mxu0
        %v843 = vadd.f32 0.0, %v842
        %v844 = vpop.f32.mrf.mxu0
        %v845 = vpop.f32.mrf.mxu0
        %v846 = vadd.f32 0.0, %v845
        %v847 = vpop.f32.mrf.mxu0
        %848 = vmatprep.mubr.bf16.mxu0 0
        %849 = vmatmul.mubr.bf16.gmra.mxu0 %v768
        %v850 = vpop.f32.mrf.mxu0
        %v851 = vadd.f32 0.0, %v850
        %v852 = vpop.f32.mrf.mxu0
        %v853 = vpop.f32.mrf.mxu0
        %v854 = vadd.f32 0.0, %v853
        %v855 = vpop.f32.mrf.mxu0
        %856 = vmatprep.mubr.bf16.mxu0 0
        %857 = vmatmul.mubr.bf16.gmra.mxu0 %v771
        %v858 = vpop.f32.mrf.mxu0
        %v859 = vadd.f32 0.0, %v858
        %v860 = vpop.f32.mrf.mxu0
        %v861 = vpop.f32.mrf.mxu0
        %v862 = vadd.f32 0.0, %v861
        %v863 = vpop.f32.mrf.mxu0
        %864 = vmatprep.mubr.bf16.mxu0 0
        %865 = vmatmul.mubr.bf16.gmra.mxu0 %v774
        %v866 = vpop.f32.mrf.mxu0
        %v867 = vadd.f32 0.0, %v866
        %v868 = vpop.f32.mrf.mxu0
        %v869 = vpop.f32.mrf.mxu0
        %v870 = vadd.f32 0.0, %v869
        %v871 = vpop.f32.mrf.mxu0
        %872 = vdwg.mxu0
        %vm873 = vcmask 130048
        %874 = vst.msk [vmem:[%s217] sm:$0xff] %vm873, %v811
        %875 = vst.msk [vmem:[%s217 + $0x8] sm:$0xff] %vm873, %v814
        %876 = vst.msk [vmem:[%s217 + $0x10] sm:$0xff] %vm873, %v819
        %877 = vst.msk [vmem:[%s217 + $0x18] sm:$0xff] %vm873, %v822
        %878 = vst.msk [vmem:[%s217 + $0x20] sm:$0xff] %vm873, %v827
        %879 = vst.msk [vmem:[%s217 + $0x28] sm:$0xff] %vm873, %v830
        %880 = vst.msk [vmem:[%s217 + $0x30] sm:$0xff] %vm873, %v835
        %881 = vst.msk [vmem:[%s217 + $0x38] sm:$0xff] %vm873, %v838
        %882 = vst.msk [vmem:[%s217 + $0x40] sm:$0xff] %vm873, %v843
        %883 = vst.msk [vmem:[%s217 + $0x48] sm:$0xff] %vm873, %v846
        %884 = vst.msk [vmem:[%s217 + $0x50] sm:$0xff] %vm873, %v851
        %885 = vst.msk [vmem:[%s217 + $0x58] sm:$0xff] %vm873, %v854
        %886 = vst.msk [vmem:[%s217 + $0x60] sm:$0xff] %vm873, %v859
        %887 = vst.msk [vmem:[%s217 + $0x68] sm:$0xff] %vm873, %v862
        %888 = vst.msk [vmem:[%s217 + $0x70] sm:$0xff] %vm873, %v867
        %889 = vst.msk [vmem:[%s217 + $0x78] sm:$0xff] %vm873, %v870
        %s890 = sand.u32 %s137, 1
        %s891 = scalar_lea.sflag [#allocation3], %s890
        %s892 = sand.u32 %s137, 1
        %s893 = smul.addr %s892, 128
        %s894 = scalar_lea.vmem [#allocation2], %s893
        // Predicated region
        $region41: #{keepres_forward.1} parent=39 // pred_check
          %p895 = pneg %p147
        $region42: #{keepres_forward.1} parent=39 // pred_check_branch
          %897 = sbr.rel (%p895) target = $region44
        $region43: #{keepres_forward.1} parent=39 // pred_region
          %s899 = ssub.s32 2048, 2048
          %900 = vsyncadd %s891, %s899
          %s901 = smul.addr %s19, 16
          %s902 = smul.addr %s901, 128
          %s903 = scalar_lea.hbm %s5, %s902
          %s904 = sshll.u32 %s894, 4
          %s905 = int_to_ptr.vmem [resolvable:$true] %s904
          %910 = dma.vmem_to_hbm [thread:$0]  %s905, 2048, %s903, %s891, 128, 128, 8
        $region44: #{keepres_forward.1} parent=39 // pred_fallthru
          _
      $region40: #{keepres_forward.1} parent=5 // pred_fallthru
        _
      %p911 = scmp.le.s32.totalorder 2, %s14
      // Predicated region
      $region45: #{keepres_forward.1} parent=5 // pred_check
        %p912 = pneg %p911
      $region46: #{keepres_forward.1} parent=5 // pred_check_branch
        %914 = sbr.rel (%p912) target = $region48
      $region47: #{keepres_forward.1} parent=5 // pred_region
        %s915 = ssub.s32 %s14, 2
        // Predicated region
        $region49: #{keepres_forward.1} parent=47 // pred_check
          %p916 = pneg %p153
        $region50: #{keepres_forward.1} parent=47 // pred_check_branch
          %918 = sbr.rel (%p916) target = $region52
        $region51: #{keepres_forward.1} parent=47 // pred_region
          %s919 = sand.u32 %s138, 1
          %s920 = scalar_lea.sflag [#allocation3], %s919
          %s921 = sand.u32 %s138, 1
          %s922 = smul.addr %s921, 128
          %s923 = scalar_lea.vmem [#allocation2], %s922
          %924 = dma.done %s920, 2048
        $region52: #{keepres_forward.1} parent=47 // pred_fallthru
          _
      $region48: #{keepres_forward.1} parent=5 // pred_fallthru
        _
    $region6: #{keepres_forward.1} parent=1 // loop_footer
      %s18 = sadd.s32 1, %s14
    $region7: #{keepres_forward.1} parent=1 // loop_footer_branch
      %13 = sbr.rel target = $region3
    $region8: #{keepres_forward.1} parent=1 // loop_exit
      _
    %925 = vsyncpa [#allocation3], 1
    %s926 = scalar_lea.sflag [#allocation3], 1
    %927 = vsyncpa %s926, 1

</llo_original>
